<compile_context>
chip_gen: v7x
topology: tpu7x:2x2x1
jax: 0.10.0
libtpu: 0.0.40
codegen_flags: <defaults>
</compile_context>

<pallas_src>
import jax
import jax.numpy as jnp
import numpy as np
from jax.experimental import pallas as pl
from jax.experimental.pallas import tpu as pltpu


def compute_gamma(drop_prob, block_size, feat_size):
    # mirrors DropBlock._compute_gamma
    return drop_prob / block_size ** 2 * (feat_size ** 2 /
                                          (feat_size - block_size + 1) ** 2)


def _block_mask_scaled(mask, block_size, dtype):
    """Scale-folded block mask, shape (1, H*W), computed once in plain XLA."""
    H, W = mask.shape
    m = (mask != 0).astype(jnp.float32)
    # Separable shifted-max dilation: dil[i, j] = max_{a,b in [0,bs)} m[i-a, j-b]
    pad_r = jnp.pad(m, ((block_size - 1, 0), (0, 0)))
    row = jnp.max(jnp.stack([pad_r[s:s + H, :] for s in range(block_size)]),
                  axis=0)
    pad_c = jnp.pad(row, ((0, 0), (block_size - 1, 0)))
    dil = jnp.max(jnp.stack([pad_c[:, s:s + W] for s in range(block_size)]),
                  axis=0)
    bm = 1.0 - dil
    # matches torch: block_mask.numel() / block_mask.sum()  (inf if sum == 0)
    scale = (H * W) / jnp.sum(bm)
    # TODO(synk): for bf16 x on v5e (no bf16 VPU) keeping the mask in f32 and
    # multiplying in f32 would be preferable; here we match x.dtype (v6e/v7x).
    return (bm * scale).astype(dtype).reshape(1, H * W)


def _pick_tbc(bc, hw, itemsize, max_block_bytes=2 << 20):
    """Rows per block: multiple of 8, ~<= 2 MiB per buffer, or full BC axis."""
    if bc % 8 != 0:
        return bc  # full-extent block on the sublane axis is always legal
    row_bytes = hw * itemsize
    tbc = (max_block_bytes // max(row_bytes, 1)) // 8 * 8
    return int(max(8, min(bc, tbc)))


def _dropblock_kernel(bm_ref, x_ref, o_ref):
    # bm_ref: (1, H*W) resident scale-folded block mask (broadcast over rows)
    # x_ref / o_ref: (TBC, H*W) lane-dense slabs
    o_ref[...] = (x_ref[...] * bm_ref[...]).astype(o_ref.dtype)


def dropblock_forward(x, mask, block_size, training=True):
    """x: (B, C, H, W); mask: (H, W) 0/1 float Bernoulli seed mask."""
    if not training:
        return x
    B, C, H, W = x.shape
    BC, HW = B * C, H * W

    # One-off host-side prep (scale folded into the mask).
    bm_scaled = _block_mask_scaled(mask, block_size, x.dtype)   # (1, H*W)

    xf = x.reshape(BC, HW)          # free reshape of contiguous NCHW
    tbc = _pick_tbc(BC, HW, x.dtype.itemsize)
    bc_pad = pl.cdiv(BC, tbc) * tbc
    if bc_pad != BC:
        xf = jnp.pad(xf, ((0, bc_pad - BC), (0, 0)))

    out = pl.pallas_call(
        _dropblock_kernel,
        out_shape=jax.ShapeDtypeStruct((bc_pad, HW), x.dtype),
        grid_spec=pltpu.PrefetchScalarGridSpec(
            num_scalar_prefetch=0,
            grid=(bc_pad // tbc,),
            in_specs=[
                pl.BlockSpec((1, HW), lambda i: (0, 0)),    # resident mask
                pl.BlockSpec((tbc, HW), lambda i: (i, 0)),  # x slab
            ],
            out_specs=pl.BlockSpec((tbc, HW), lambda i: (i, 0)),
        ),
        compiler_params=pltpu.CompilerParams(
            # No cross-step state -> independent steps; shards across the two
            # TensorCores on v7x, harmless on v5e/v6e.
            dimension_semantics=("parallel",)),
    )(bm_scaled, xf)

    if bc_pad != BC:
        out = out[:BC]
    return out.reshape(B, C, H, W)


def _reference(x, mask, block_size):
    """Pure-JAX replica of the PyTorch forward (training path)."""
    H, W = mask.shape
    if jnp.sum(mask != 0) == 0:
        return x
    dil = jnp.zeros_like(mask)
    for a in range(block_size):
        for b in range(block_size):
            shifted = jnp.pad(mask, ((a, 0), (b, 0)))[:H, :W]
            dil = jnp.maximum(dil, shifted)
    bm = 1.0 - dil
    return x * bm[None, None] * (H * W) / jnp.sum(bm)


if __name__ == "__main__":
    B, C, H, W = 2, 4, 16, 16
    block_size = 3
    feat_size = H          # feat_size > block_size, as the module asserts
    drop_rate = 0.1

    key = jax.random.PRNGKey(0)
    kx, km = jax.random.split(key)
    x = jax.random.normal(kx, (B, C, H, W), dtype=jnp.float32)

    # Bernoulli seed-mask sampling (torch.distributions.Bernoulli.sample) is
    # host-side glue, mirrored with jax.random; the hot path (mask apply over
    # all B*C*H*W elements) runs in the Pallas kernel.
    gamma = compute_gamma(drop_rate, block_size, feat_size)
    mask = jax.random.bernoulli(km, gamma, (H, W)).astype(jnp.float32)

    out = dropblock_forward(x, mask, block_size, training=True)
    out = jax.block_until_ready(out)

    expected = _reference(x, mask, block_size)
    assert out.shape == x.shape and out.dtype == x.dtype
    assert np.allclose(np.asarray(out), np.asarray(expected),
                       rtol=1e-5, atol=1e-5)
    print("KERNEL_OK")
</pallas_src>

<mosaic_0001>
module attributes {stable_mosaic.version = 11 : i64} {
  func.func @_dropblock_kernel(%arg0: i32, %arg1: memref<1x256xf32, #tpu.memory_space<vmem>>, %arg2: memref<8x256xf32, #tpu.memory_space<vmem>>, %arg3: memref<8x256xf32, #tpu.memory_space<vmem>>) attributes {dimension_semantics = [#tpu.dimension_semantics<parallel>], iteration_bounds = array<i64: 1>, scalar_prefetch = 0 : i64, scratch_operands = 0 : i64, tpu.core_type = #tpu.core_type<tc>, window_params = [{pipeline_mode = #tpu.pipeline_mode<synchronous>, transform_indices = @transform_0, window_bounds = array<i64: 1, 256>}, {transform_indices = @transform_1, window_bounds = array<i64: 8, 256>}, {transform_indices = @transform_2, window_bounds = array<i64: 8, 256>}]} {
    %c0 = arith.constant 0 : index
    %c0_0 = arith.constant 0 : index
    %0 = vector.load %arg2[%c0, %c0_0] : memref<8x256xf32, #tpu.memory_space<vmem>>, vector<8x256xf32>
    %c0_1 = arith.constant 0 : index
    %c0_2 = arith.constant 0 : index
    %1 = vector.load %arg1[%c0_1, %c0_2] : memref<1x256xf32, #tpu.memory_space<vmem>>, vector<1x256xf32>
    %2 = vector.broadcast %1 : vector<1x256xf32> to vector<8x256xf32>
    %3 = arith.mulf %0, %2 : vector<8x256xf32>
    %c0_3 = arith.constant 0 : index
    %c0_4 = arith.constant 0 : index
    %4 = vector.load %arg3[%c0_3, %c0_4] : memref<8x256xf32, #tpu.memory_space<vmem>>, vector<8x256xf32>
    tpu.vector_store %arg3[%c0_3, %c0_4], %3 {strides = array<i32>} : memref<8x256xf32, #tpu.memory_space<vmem>>, vector<8x256xf32>,
    return
  }
  func.func @transform_0(%arg0: i32) -> (i32, i32) {
    %c0_i32 = arith.constant 0 : i32
    %c0_i32_0 = arith.constant 0 : i32
    %c0_i32_1 = arith.constant 0 : i32
    return %c0_i32, %c0_i32_0 : i32, i32
  }
  func.func @transform_1(%arg0: i32) -> (i32, i32) {
    %c0_i32 = arith.constant 0 : i32
    %c0_i32_0 = arith.constant 0 : i32
    return %arg0, %c0_i32 : i32, i32
  }
  func.func @transform_2(%arg0: i32) -> (i32, i32) {
    %c0_i32 = arith.constant 0 : i32
    %c0_i32_0 = arith.constant 0 : i32
    return %arg0, %c0_i32 : i32, i32
  }
}

</mosaic_0001>

<llo_original>
// kernel: tpu_custom_call.1
$region0: #{tpu_custom_call.1}
  #allocation0 [shape = 'u32[]', space=smem, size = 0x4, offset = 0x4, fixed_abs, tag = 'smem constant byte address 0x4 - core index']
  #allocation1 [shape = 'u32[144,128]{1,0:T(1,128)}', space=vmem, size = 0x12000, scoped, tag = 'internal scratch']
  %s0 = inlined_call_operand.hbm [shape: f32[1,256], index: 0, kind: input, shape index: {}]
  %s1 = inlined_call_operand.hbm [shape: f32[8,256], index: 1, kind: input, shape index: {}]
  %s2 = inlined_call_operand.hbm [shape: f32[8,256], index: 2, kind: output, shape index: {}]
  %s3 = sld [smem:[#allocation0]]
  $region26: #{tpu_custom_call.1} parent=0
    _
  %s5 = ssub.s32 1, %s3
  %s6 = scalar_select 0, %s5, %s3
  $region1: #{tpu_custom_call.1} parent=0
    #allocation2 [shape = 'u8[1024]{0}', space=vmem, size = 0x400, scoped, tag = 'input window, operand 0, single buffered']
    #allocation3 [shape = 's32[1]{0}', space=sflag, size = 0x4, scoped, tag = 'scoped memory for tpu_custom_call.1']
    #allocation4 [shape = 's32[1]{0}', space=sflag, size = 0x4, scoped, tag = 'scoped memory for tpu_custom_call.1']
    #allocation5 [shape = 'u8[8192]{0}', space=vmem, size = 0x2000, scoped, tag = 'input window, operand 1, single buffered']
    #allocation6 [shape = 's32[1]{0}', space=sflag, size = 0x4, scoped, tag = 'scoped memory for tpu_custom_call.1']
    #allocation7 [shape = 'u8[8192]{0}', space=vmem, size = 0x2000, scoped, tag = 'output window, operand 0, single buffered']
    %7 = vsyncpa [#allocation3], 0
    %8 = vsyncpa [#allocation6], 0
    %9 = vsyncpa [#allocation4], 0
    // Predicated region
    $region2: #{tpu_custom_call.1} parent=1 // pred_check
      _
    $region3: #{tpu_custom_call.1} parent=1 // pred_check_branch
      %11 = sbr.rel (0) target = $region5
    $region4: #{tpu_custom_call.1} parent=1 // pred_region
      %s13 = ssub.s32 32, 32
      %14 = vsyncadd [#allocation3], %s13
      %s16 = sshll.u32 [#allocation2], 4
      %s17 = int_to_ptr.vmem [resolvable:$true] %s16
      %19 = dma.hbm_to_vmem [thread:$0]  %s0, 32, %s17, [#allocation3]
    $region5: #{tpu_custom_call.1} parent=1 // pred_fallthru
      _
    // Predicated region
    $region6: #{tpu_custom_call.1} parent=1 // pred_check
      _
    $region7: #{tpu_custom_call.1} parent=1 // pred_check_branch
      %21 = sbr.rel (0) target = $region9
    $region8: #{tpu_custom_call.1} parent=1 // pred_region
      %s23 = ssub.s32 256, 256
      %24 = vsyncadd [#allocation6], %s23
      %s26 = sshll.u32 [#allocation5], 4
      %s27 = int_to_ptr.vmem [resolvable:$true] %s26
      %29 = dma.hbm_to_vmem [thread:$0]  %s1, 256, %s27, [#allocation6]
    $region9: #{tpu_custom_call.1} parent=1 // pred_fallthru
      _
    // Predicated region
    $region10: #{tpu_custom_call.1} parent=1 // pred_check
      _
    $region11: #{tpu_custom_call.1} parent=1 // pred_check_branch
      %31 = sbr.rel (0) target = $region13
    $region12: #{tpu_custom_call.1} parent=1 // pred_region
      %32 = dma.done [#allocation3], 32
    $region13: #{tpu_custom_call.1} parent=1 // pred_fallthru
      _
    // Predicated region
    $region14: #{tpu_custom_call.1} parent=1 // pred_check
      _
    $region15: #{tpu_custom_call.1} parent=1 // pred_check_branch
      %34 = sbr.rel (0) target = $region17
    $region16: #{tpu_custom_call.1} parent=1 // pred_region
      %35 = dma.done [#allocation6], 256
    $region17: #{tpu_custom_call.1} parent=1 // pred_fallthru
      _
    %v36 = vld [vmem:[#allocation5] sm:$0xff]
    %v37 = vld [vmem:[#allocation5 + $0x8] sm:$0xff]
    %v38 = vld [vmem:[#allocation2] sm:$0x3]
    %v40 = vlaneseq
    %v41 = vshrl.u32 %v40, 7
    %v42 = vsub.s32 0, %v41
    %v43 = vrot.slane %v38, %v42
    %v44 = vlaneseq
    %v45 = vshrl.u32 %v44, 7
    %v46 = vsub.s32 1, %v45
    %v47 = vrot.slane %v38, %v46
    %v50 = vmul.f32 %v36, %v43
    %v51 = vmul.f32 %v37, %v47
    %52 = vst [vmem:[#allocation7] sm:$0xff] %v50
    %53 = vst [vmem:[#allocation7 + $0x8] sm:$0xff] %v51
    // Predicated region
    $region18: #{tpu_custom_call.1} parent=1 // pred_check
      _
    $region19: #{tpu_custom_call.1} parent=1 // pred_check_branch
      %55 = sbr.rel (0) target = $region21
    $region20: #{tpu_custom_call.1} parent=1 // pred_region
      %s57 = ssub.s32 256, 256
      %58 = vsyncadd [#allocation4], %s57
      %s60 = sshll.u32 [#allocation7], 4
      %s61 = int_to_ptr.vmem [resolvable:$true] %s60
      %63 = dma.vmem_to_hbm [thread:$0]  %s61, 256, %s2, [#allocation4]
    $region21: #{tpu_custom_call.1} parent=1 // pred_fallthru
      _
    // Predicated region
    $region22: #{tpu_custom_call.1} parent=1 // pred_check
      _
    $region23: #{tpu_custom_call.1} parent=1 // pred_check_branch
      %65 = sbr.rel (0) target = $region25
    $region24: #{tpu_custom_call.1} parent=1 // pred_region
      %66 = dma.done [#allocation4], 256
    $region25: #{tpu_custom_call.1} parent=1 // pred_fallthru
      _
    %67 = vsyncpa [#allocation3], 1
    %68 = vsyncpa [#allocation6], 1
    %69 = vsyncpa [#allocation4], 1

</llo_original>
